<compile_context>
chip_gen: v7x
topology: tpu7x:2x2x1
jax: 0.10.0
libtpu: 0.0.40
codegen_flags: <defaults>
</compile_context>

<pallas_src>
import functools
import numpy as np
import jax
import jax.numpy as jnp
from jax.experimental import pallas as pl
from jax.experimental.pallas import tpu as pltpu


# --------------------- host-side rotation operator build ---------------------

def _build_rotation_matrices_np(angles, s):
    """R[a] (s*s, s*s): bilinear rotation-resampling matching
    F.affine_grid + F.grid_sample(bilinear, zero padding, align_corners=False)."""
    nang = len(angles)
    R = np.zeros((nang, s * s, s * s), dtype=np.float32)
    ii, jj = np.meshgrid(np.arange(s), np.arange(s), indexing='ij')
    xn = (2.0 * jj + 1.0) / s - 1.0
    yn = (2.0 * ii + 1.0) / s - 1.0
    qidx = (ii * s + jj).ravel()
    for a, th in enumerate(angles):
        c, sn = np.cos(th), np.sin(th)
        xs = c * xn - sn * yn
        ys = sn * xn + c * yn
        xp = ((xs + 1.0) * s - 1.0) / 2.0
        yp = ((ys + 1.0) * s - 1.0) / 2.0
        x0 = np.floor(xp).astype(np.int64)
        y0 = np.floor(yp).astype(np.int64)
        for dy in (0, 1):
            for dx in (0, 1):
                xi = x0 + dx
                yi = y0 + dy
                w = (1.0 - np.abs(xp - xi)) * (1.0 - np.abs(yp - yi))
                valid = (xi >= 0) & (xi < s) & (yi >= 0) & (yi < s)
                pidx = np.where(valid, yi * s + xi, 0).ravel()
                wv = np.where(valid, w, 0.0).ravel().astype(np.float32)
                np.add.at(R[a], (qidx, pidx), wv)
    return R


def build_operators(angles, s, nang, f, H, W, zero_angle_idx):
    """Precompute rotation operators, valid-lane mask, initial pose slab."""
    R = _build_rotation_matrices_np(np.asarray(angles), s)      # (nang, ss, ss)
    ss = s * s
    pad = (s - 1) // 2
    # RWR columns ordered (dy, dx, a) with the conv_transpose 180-deg spatial
    # flip folded in:  RWR[p, dy*(s*nang) + dx*nang + a] = R[a, (s-1-dy, s-1-dx), p]
    RWR = np.zeros((ss, s * s * nang), np.float32)
    for dy in range(s):
        for dx in range(s):
            q = (s - 1 - dy) * s + (s - 1 - dx)
            for a in range(nang):
                RWR[:, dy * (s * nang) + dx * nang + a] = R[a, q, :]
    # RLOC columns ordered (a, dy, dx) (no flip): RLOC[p, a*ss + q] = R[a, q, p]
    RLOC = np.ascontiguousarray(np.transpose(R, (2, 0, 1)).reshape(ss, nang * ss))
    pw = W + 2 * pad
    ph = H + 2 * pad
    slab = ((ph * pw + 127) // 128) * 128                        # 640 = 5*128
    vmask = np.zeros((1, slab), np.float32)
    for y in range(H):
        base = (pad + y) * pw + pad
        vmask[0, base:base + W] = 1.0
    poses0 = np.zeros((nang, slab), np.float32)
    center = (pad + (H - 1) // 2) * pw + (pad + (W - 1) // 2)
    poses0[zero_angle_idx, center] = 1.0
    return dict(R=R, RWR=RWR, RLOC=RLOC, vmask=vmask, poses0=poses0,
                pw=pw, ph=ph, slab=slab)


# ------------------------- roll convention probe ------------------------------

def _roll_probe_kernel(x_ref, o_ref):
    o_ref[...] = pltpu.roll(x_ref[...], 1, axis=1)


def _detect_roll_sign():
    """Returns +1 if pltpu.roll matches jnp.roll semantics, else -1."""
    x = jnp.tile(jnp.arange(128, dtype=jnp.float32)[None, :], (8, 1))
    y = pl.pallas_call(
        _roll_probe_kernel,
        out_shape=jax.ShapeDtypeStruct((8, 128), jnp.float32))(x)
    return 1 if float(np.asarray(y)[0, 1]) == 0.0 else -1


# ----------------------------- Pallas kernels ---------------------------------

def _rotate_kernel(a_ref, x_ref, rwr_ref, rloc_ref, giw_ref, loc_ref):
    """One-time frame prep: (W_ih-folded) registration weights and localize
    weights for ALL frames, two bf16 matmuls, f32 accumulation."""
    giw_ref[...] = jnp.dot(a_ref[...], rwr_ref[...],
                           preferred_element_type=jnp.float32).astype(giw_ref.dtype)
    loc_ref[...] = jnp.dot(x_ref[...], rloc_ref[...],
                           preferred_element_type=jnp.float32).astype(loc_ref.dtype)


def _fused_kernel(giw_ref, wloc_ref, maps0_ref, poses0_ref, vmask_ref,
                  whh_ref, bih_ref, bhh_ref,
                  maps_out_ref, poses_out_ref,
                  maps_sc, poses_sc, px_sc, mx_sc,
                  *, f, nang, s, pw, slab, gru_scalar, roll_sign):
    """One (batch, timestep) grid point: conv_transpose registration + GRUCell
    map write, then channel softmax + grouped cross-correlation + pose softmax.
    maps/poses are carried in VMEM scratch across the "arbitrary" time axis."""
    l = pl.program_id(1)
    rad = (s - 1) // 2
    vmask = vmask_ref[...]                                      # (1, slab) f32

    @pl.when(l == 0)
    def _init():
        maps_sc[...] = maps0_ref[0]
        poses_sc[...] = poses0_ref[...]

    def lane_roll(x, amt):
        # emulates jnp.roll(x, amt, axis=1); roll_sign fixes the hw convention
        k = (roll_sign * amt) % slab
        if k == 0:
            return x
        return pltpu.roll(x, k, axis=1)

    # ------------- write memory: conv_transpose registration + GRU -----------
    poses_slab = poses_sc[...]                                  # (nang, slab) f32
    for dx in range(s):                                         # x-shift stack
        px_sc[pl.ds(dx * nang, nang), :] = lane_roll(
            poses_slab, rad - dx).astype(jnp.bfloat16)

    gi = jnp.zeros((3 * f, slab), jnp.float32)
    for dy in range(s):                                         # y-shift + MXU
        rolled = lane_roll(px_sc[...], (rad - dy) * pw)         # (s*nang, slab) bf16
        gi = gi + jnp.dot(giw_ref[0, 0, dy], rolled,
                          preferred_element_type=jnp.float32)
    gi = gi + bih_ref[...]

    h = maps_sc[...]                                            # (f, slab) f32
    gh = jnp.dot(whh_ref[...], h.astype(jnp.bfloat16),
                 preferred_element_type=jnp.float32) + bhh_ref[...]
    r = jax.nn.sigmoid(gi[0:f] + gh[0:f])
    z = jax.nn.sigmoid(gi[f:2 * f] + gh[f:2 * f])
    n = jnp.tanh(gi[2 * f:3 * f] + r * gh[2 * f:3 * f])
    h_new = ((1.0 - z) * n + z * h) * vmask                     # keep slab pads 0
    maps_sc[...] = h_new
    maps_out_ref[0, 0] = h_new

    # channel softmax over f channels (sublane reductions -> XLU)
    xs = h_new * gru_scalar
    ech = jnp.exp(xs - jnp.max(xs, axis=0, keepdims=True))
    msm = (ech / jnp.sum(ech, axis=0, keepdims=True)) * vmask   # (f, slab) f32

    # ------------- localize: grouped cross-correlation + pose softmax --------
    for dx in range(s):
        mx_sc[pl.ds(dx * f, f), :] = lane_roll(msm, rad - dx).astype(jnp.bfloat16)

    scores = jnp.zeros((nang, slab), jnp.float32)
    for dy in range(s):
        rolled = lane_roll(mx_sc[...], (rad - dy) * pw)         # (s*f, slab) bf16
        scores = scores + jnp.dot(wloc_ref[0, 0, dy], rolled,
                                  preferred_element_type=jnp.float32)

    scores = scores + (vmask - 1.0) * 1e30                      # pads -> -inf
    m = jnp.max(jnp.max(scores, axis=1, keepdims=True), axis=0, keepdims=True)
    e = jnp.exp(scores - m) * vmask
    tot = jnp.sum(jnp.sum(e, axis=1, keepdims=True), axis=0, keepdims=True)
    poses_new = e * (1.0 / tot)
    poses_sc[...] = poses_new
    poses_out_ref[0, 0] = poses_new


# ------------------------------ forward wrapper -------------------------------

def mapnet_yolo_forward(image_cls, maps0, w_ih, w_hh, b_ih, b_hh,
                        rwr, rloc, vmask, poses0, *,
                        pw, ph, slab, gru_scalar, roll_sign):
    """image_cls: (L, bs, n_cls, s, s); maps0: (bs, n_cls, H, W)."""
    L, bs, f, s, _ = image_cls.shape
    ss = s * s
    nang = poses0.shape[0]
    H, W = maps0.shape[-2:]
    pad = (s - 1) // 2

    # ---- one-time frame prep: fold W_ih, rotate all frames (Pallas matmuls) ----
    x6 = image_cls.astype(jnp.float32).reshape(L, bs, f, ss)
    a_all = jnp.einsum('jc,lbcp->lbjp', w_ih.astype(jnp.float32), x6)
    a_flat = a_all.reshape(L * bs * 3 * f, ss).astype(jnp.bfloat16)
    x_flat = x6.reshape(L * bs * f, ss).astype(jnp.bfloat16)

    g_all, h_all = pl.pallas_call(
        _rotate_kernel,
        out_shape=(jax.ShapeDtypeStruct((L * bs * 3 * f, s * s * nang), jnp.bfloat16),
                   jax.ShapeDtypeStruct((L * bs * f, nang * ss), jnp.bfloat16)),
    )(a_flat, x_flat, rwr.astype(jnp.bfloat16), rloc.astype(jnp.bfloat16))

    # registration weights (W_ih + conv_transpose flip folded): (L-1,bs,9,3f,9*nang)
    giw_all = jnp.transpose(
        g_all.reshape(L, bs, 3 * f, s, s * nang), (0, 1, 3, 2, 4))[:L - 1]
    # localize weights (class-0 channel zeroed): (L-1, bs, 9, nang, 9*f)
    h6 = h_all.reshape(L, bs, f, nang, s, s)
    h6 = h6 * (jnp.arange(f) > 0).astype(h6.dtype)[None, None, :, None, None, None]
    wloc_all = jnp.transpose(h6, (0, 1, 4, 3, 5, 2)).reshape(L, bs, s, nang, s * f)[1:]

    # initial map in zero-padded slab layout (lanes = slab = 5*128)
    m0 = jnp.pad(maps0.astype(jnp.float32),
                 ((0, 0), (0, 0), (pad, pad), (pad, pad))).reshape(bs, f, ph * pw)
    m0 = jnp.pad(m0, ((0, 0), (0, 0), (0, slab - ph * pw)))

    kern = functools.partial(
        _fused_kernel, f=f, nang=nang, s=s, pw=pw, slab=slab,
        gru_scalar=float(gru_scalar), roll_sign=int(roll_sign))

    maps_slab, poses_slab = pl.pallas_call(
        kern,
        out_shape=(jax.ShapeDtypeStruct((L - 1, bs, f, slab), jnp.float32),
                   jax.ShapeDtypeStruct((L - 1, bs, nang, slab), jnp.float32)),
        grid=(bs, L - 1),
        in_specs=[
            pl.BlockSpec((1, 1, s, 3 * f, s * nang), lambda b, l: (l, b, 0, 0, 0)),
            pl.BlockSpec((1, 1, s, nang, s * f), lambda b, l: (l, b, 0, 0, 0)),
            pl.BlockSpec((1, f, slab), lambda b, l: (b, 0, 0)),
            pl.BlockSpec((nang, slab), lambda b, l: (0, 0)),
            pl.BlockSpec((1, slab), lambda b, l: (0, 0)),
            pl.BlockSpec((3 * f, f), lambda b, l: (0, 0)),
            pl.BlockSpec((3 * f, 1), lambda b, l: (0, 0)),
            pl.BlockSpec((3 * f, 1), lambda b, l: (0, 0)),
        ],
        out_specs=(
            pl.BlockSpec((1, 1, f, slab), lambda b, l: (l, b, 0, 0)),
            pl.BlockSpec((1, 1, nang, slab), lambda b, l: (l, b, 0, 0)),
        ),
        scratch_shapes=[
            pltpu.VMEM((f, slab), jnp.float32),          # map carry
            pltpu.VMEM((nang, slab), jnp.float32),       # pose carry
            pltpu.VMEM((s * nang, slab), jnp.bfloat16),  # x-shifted pose stack
            pltpu.VMEM((s * f, slab), jnp.bfloat16),     # x-shifted map stack
        ],
        compiler_params=pltpu.CompilerParams(
            dimension_semantics=("parallel", "arbitrary")),
    )(giw_all, wloc_all, m0, poses0, vmask,
      w_hh.astype(jnp.bfloat16),
      b_ih.reshape(-1, 1).astype(jnp.float32),
      b_hh.reshape(-1, 1).astype(jnp.float32))

    def slab_to_dense(xs):
        xs = xs[..., :ph * pw].reshape(*xs.shape[:-1], ph, pw)
        return xs[..., pad:pad + H, pad:pad + W]

    maps_pred = slab_to_dense(maps_slab)         # (L-1, bs, f, H, W)
    poses_pred = slab_to_dense(poses_slab)       # (L-1, bs, nang, H, W)

    outputs = {'x_gp': image_cls, 'poses': poses_pred,
               'maps_pred': maps_pred, 'map_cls': None}
    return outputs, maps_pred[-1]


# ------------------------- pure-JAX (XLA) reference ---------------------------

def reference_forward(image_cls, maps0, R, w_ih, w_hh, b_ih, b_hh, *,
                      zero_angle_idx, gru_scalar):
    L, bs, f, s, _ = image_cls.shape
    nang = R.shape[0]
    H, W = maps0.shape[-2:]
    rad = (s - 1) // 2
    x6 = image_cls.astype(jnp.float32).reshape(L, bs, f, s * s)
    o_rot = jnp.einsum('aqp,lbcp->lbacq', R, x6).reshape(L, bs, nang, f, s, s)
    maps = maps0.astype(jnp.float32)
    poses = jnp.zeros((bs, nang, H, W), jnp.float32)
    poses = poses.at[:, zero_angle_idx, (H - 1) // 2, (W - 1) // 2].set(1.0)
    maps_all, poses_all = [], []
    for l in range(L - 1):
        p_pad = jnp.pad(poses, ((0, 0), (0, 0), (rad, rad), (rad, rad)))
        cols = jnp.stack([p_pad[:, :, dy:dy + H, dx:dx + W]
                          for dy in range(s) for dx in range(s)], axis=2)
        wflip = o_rot[l][:, :, :, ::-1, ::-1].reshape(bs, nang, f, s * s)
        o_reg = jnp.einsum('bact,batyx->bcyx', wflip, cols)
        gi = jnp.einsum('jc,bcyx->bjyx', w_ih, o_reg) + b_ih[None, :, None, None]
        gh = jnp.einsum('jc,bcyx->bjyx', w_hh, maps) + b_hh[None, :, None, None]
        r = jax.nn.sigmoid(gi[:, 0:f] + gh[:, 0:f])
        z = jax.nn.sigmoid(gi[:, f:2 * f] + gh[:, f:2 * f])
        n = jnp.tanh(gi[:, 2 * f:3 * f] + r * gh[:, 2 * f:3 * f])
        maps = (1.0 - z) * n + z * maps
        maps_all.append(maps)
        sm = jax.nn.softmax(maps * gru_scalar, axis=1)[:, 1:]
        m_pad = jnp.pad(sm, ((0, 0), (0, 0), (rad, rad), (rad, rad)))
        colsm = jnp.stack([m_pad[:, :, dy:dy + H, dx:dx + W]
                           for dy in range(s) for dx in range(s)], axis=2)
        wl = o_rot[l + 1][:, :, 1:].reshape(bs, nang, f - 1, s * s)
        scores = jnp.einsum('bact,bctyx->bayx', wl, colsm)
        poses = jax.nn.softmax(scores.reshape(bs, -1), axis=-1).reshape(bs, nang, H, W)
        poses_all.append(poses)
    return jnp.stack(maps_all, 0), jnp.stack(poses_all, 0)


# --------------------------------- main ----------------------------------------

if __name__ == "__main__":
    L, bs, n_cls = 3, 2, 4                 # f == num_cls == map_shape[0]
    map_size, local_size = 16, 9           # map_shape=(4,16,16), local_map_shape=(4,9,9)
    angles_np = np.array([0.0, np.pi / 2, np.pi, 3 * np.pi / 2], dtype=np.float32)
    gru_scalar = 1.0
    f = n_cls
    nang = angles_np.shape[0]
    zero_angle_idx = int(np.where(angles_np == 0.0)[0][0])

    key = jax.random.PRNGKey(0)
    k1, k2, k3, k4, k5, k6 = jax.random.split(key, 6)
    image_cls = jax.random.uniform(k1, (L, bs, n_cls, local_size, local_size),
                                   jnp.float32)
    maps0 = 0.1 * jax.random.normal(k2, (bs, n_cls, map_size, map_size), jnp.float32)

    # nn.GRUCell(f, f) deterministic init (uniform(-1/sqrt(f), 1/sqrt(f)))
    kg = 1.0 / np.sqrt(f)
    w_ih = jax.random.uniform(k3, (3 * f, f), jnp.float32, -kg, kg)
    w_hh = jax.random.uniform(k4, (3 * f, f), jnp.float32, -kg, kg)
    b_ih = jax.random.uniform(k5, (3 * f,), jnp.float32, -kg, kg)
    b_hh = jax.random.uniform(k6, (3 * f,), jnp.float32, -kg, kg)

    ops = build_operators(angles_np, local_size, nang, f, map_size, map_size,
                          zero_angle_idx)
    roll_sign = _detect_roll_sign()

    run = jax.jit(functools.partial(
        mapnet_yolo_forward, pw=ops['pw'], ph=ops['ph'], slab=ops['slab'],
        gru_scalar=gru_scalar, roll_sign=roll_sign))

    outputs, final_maps = run(image_cls, maps0, w_ih, w_hh, b_ih, b_hh,
                              jnp.asarray(ops['RWR']), jnp.asarray(ops['RLOC']),
                              jnp.asarray(ops['vmask']), jnp.asarray(ops['poses0']))
    jax.block_until_ready((outputs['poses'], outputs['maps_pred'], final_maps))

    assert outputs['poses'].shape == (L - 1, bs, nang, map_size, map_size)
    assert outputs['maps_pred'].shape == (L - 1, bs, f, map_size, map_size)
    assert final_maps.shape == (bs, f, map_size, map_size)
    # pose maps are probability distributions over (nangles, H, W)
    np.testing.assert_allclose(
        np.asarray(outputs['poses']).reshape(L - 1, bs, -1).sum(-1), 1.0, rtol=1e-4)

    # cross-check against an f32 pure-XLA reference (loose tol: bf16 MXU operands)
    ref_fn = jax.jit(functools.partial(
        reference_forward, zero_angle_idx=zero_angle_idx, gru_scalar=gru_scalar))
    ref_maps, ref_poses = ref_fn(image_cls, maps0, jnp.asarray(ops['R']),
                                 w_ih, w_hh, b_ih, b_hh)
    np.testing.assert_allclose(np.asarray(outputs['maps_pred']),
                               np.asarray(ref_maps), rtol=5e-2, atol=3e-2)
    np.testing.assert_allclose(np.asarray(outputs['poses']),
                               np.asarray(ref_poses), rtol=1.5e-1, atol=1e-3)

    print("KERNEL_OK")
</pallas_src>

<mosaic_0001>
module attributes {stable_mosaic.version = 11 : i64} {
  func.func @_roll_probe_kernel(%arg0: memref<8x128xf32, #tpu.memory_space<vmem>>, %arg1: memref<8x128xf32, #tpu.memory_space<vmem>>) attributes {dimension_semantics = [], scalar_prefetch = 0 : i64, scratch_operands = 0 : i64, tpu.core_type = #tpu.core_type<tc>} {
    %c0 = arith.constant 0 : index
    %c0_0 = arith.constant 0 : index
    %0 = vector.load %arg0[%c0, %c0_0] : memref<8x128xf32, #tpu.memory_space<vmem>>, vector<8x128xf32>
    %c1_i32 = arith.constant 1 : i32
    %1 = tpu.dynamic_rotate %0 by %c1_i32 dim 1 : vector<8x128xf32>, i32 -> vector<8x128xf32>
    %c0_1 = arith.constant 0 : index
    %c0_2 = arith.constant 0 : index
    %2 = vector.load %arg1[%c0_1, %c0_2] : memref<8x128xf32, #tpu.memory_space<vmem>>, vector<8x128xf32>
    tpu.vector_store %arg1[%c0_1, %c0_2], %1 {strides = array<i32>} : memref<8x128xf32, #tpu.memory_space<vmem>>, vector<8x128xf32>,
    return
  }
}

</mosaic_0001>

<llo_original>
// kernel: tpu_custom_call.1
$region0: #{tpu_custom_call.1}
  #allocation0 [shape = 'u32[]', space=smem, size = 0x4, offset = 0x4, fixed_abs, tag = 'smem constant byte address 0x4 - core index']
  #allocation1 [shape = 'u32[144,128]{1,0:T(1,128)}', space=vmem, size = 0x12000, scoped, tag = 'internal scratch']
  %s0 = inlined_call_operand.hbm [shape: f32[8,128], index: 0, kind: input, shape index: {}]
  %s1 = inlined_call_operand.hbm [shape: f32[8,128], index: 1, kind: output, shape index: {}]
  %s2 = sld [smem:[#allocation0]]
  $region18: #{tpu_custom_call.1} parent=0
    _
  %s4 = ssub.s32 1, %s2
  %s5 = scalar_select 0, %s4, %s2
  $region1: #{tpu_custom_call.1} parent=0
    #allocation2 [shape = 'u8[4096]{0}', space=vmem, size = 0x1000, scoped, tag = 'input window, operand 0, single buffered']
    #allocation3 [shape = 's32[1]{0}', space=sflag, size = 0x4, scoped, tag = 'scoped memory for tpu_custom_call.1']
    #allocation4 [shape = 's32[1]{0}', space=sflag, size = 0x4, scoped, tag = 'scoped memory for tpu_custom_call.1']
    #allocation5 [shape = 'u8[4096]{0}', space=vmem, size = 0x1000, scoped, tag = 'output window, operand 0, single buffered']
    %6 = vsyncpa [#allocation3], 0
    %7 = vsyncpa [#allocation4], 0
    // Predicated region
    $region2: #{tpu_custom_call.1} parent=1 // pred_check
      _
    $region3: #{tpu_custom_call.1} parent=1 // pred_check_branch
      %9 = sbr.rel (0) target = $region5
    $region4: #{tpu_custom_call.1} parent=1 // pred_region
      %s11 = ssub.s32 128, 128
      %12 = vsyncadd [#allocation3], %s11
      %s14 = sshll.u32 [#allocation2], 4
      %s15 = int_to_ptr.vmem [resolvable:$true] %s14
      %17 = dma.hbm_to_vmem [thread:$0]  %s0, 128, %s15, [#allocation3]
    $region5: #{tpu_custom_call.1} parent=1 // pred_fallthru
      _
    // Predicated region
    $region6: #{tpu_custom_call.1} parent=1 // pred_check
      _
    $region7: #{tpu_custom_call.1} parent=1 // pred_check_branch
      %19 = sbr.rel (0) target = $region9
    $region8: #{tpu_custom_call.1} parent=1 // pred_region
      %20 = dma.done [#allocation3], 128
    $region9: #{tpu_custom_call.1} parent=1 // pred_fallthru
      _
    %v21 = vld [vmem:[#allocation2] sm:$0xff]
    %22 = vrot.lane.b32.xlu0 %v21, 1
    %v23 = vpop.permute.xlu0 %22
    %24 = vst [vmem:[#allocation5] sm:$0xff] %v23
    // Predicated region
    $region10: #{tpu_custom_call.1} parent=1 // pred_check
      _
    $region11: #{tpu_custom_call.1} parent=1 // pred_check_branch
      %26 = sbr.rel (0) target = $region13
    $region12: #{tpu_custom_call.1} parent=1 // pred_region
      %s28 = ssub.s32 128, 128
      %29 = vsyncadd [#allocation4], %s28
      %s31 = sshll.u32 [#allocation5], 4
      %s32 = int_to_ptr.vmem [resolvable:$true] %s31
      %34 = dma.vmem_to_hbm [thread:$0]  %s32, 128, %s1, [#allocation4]
    $region13: #{tpu_custom_call.1} parent=1 // pred_fallthru
      _
    // Predicated region
    $region14: #{tpu_custom_call.1} parent=1 // pred_check
      _
    $region15: #{tpu_custom_call.1} parent=1 // pred_check_branch
      %36 = sbr.rel (0) target = $region17
    $region16: #{tpu_custom_call.1} parent=1 // pred_region
      %37 = dma.done [#allocation4], 128
    $region17: #{tpu_custom_call.1} parent=1 // pred_fallthru
      _
    %38 = vsyncpa [#allocation3], 1
    %39 = vsyncpa [#allocation4], 1

</llo_original>
